<compile_context>
chip_gen: v7x
topology: tpu7x:2x2x1
jax: 0.10.0
libtpu: 0.0.40
codegen_flags: <defaults>
</compile_context>

<pallas_src>
import functools

import jax
import jax.numpy as jnp
from jax.experimental import pallas as pl
from jax.experimental.pallas import tpu as pltpu


LANE = 128
SUBLANE_BF16 = 16


# ----------------------------------------------------------------------------
# Tiling / budget helpers
# ----------------------------------------------------------------------------
def _round_up(x, m):
    return ((x + m - 1) // m) * m


def _cdiv(a, b):
    return (a + b - 1) // b


def _vmem_limit_bytes():
    """Generation-aware scoped VMEM limit (v5e/v6e: 128 MiB physical, v7x: 64 MiB)."""
    try:
        cap = int(pltpu.get_tpu_info().vmem_capacity_bytes)
    except Exception:
        cap = 64 << 20                      # conservative fallback (v7x per-core VMEM)
    return max(int(cap * 0.8), 16 << 20)


def _pick_row_tile(n_rows, streamed_bytes_per_row, resident_bytes, vmem_limit):
    """Largest row tile (multiple of 16 for bf16 sublane packing) whose
    double-buffered streamed footprint + double-buffered resident weights fit
    ~60% of the scoped VMEM limit.  Guarantees >=2 grid steps when possible so
    dimension_semantics='parallel' can shard across v7x's 2 TensorCores."""
    budget = int(vmem_limit * 0.6) - 2 * resident_bytes
    budget = max(budget, 1 << 20)
    tile = SUBLANE_BF16
    for cand in (4096, 2048, 1024, 512, 256, 128, 64, 32, 16):
        if 2 * cand * streamed_bytes_per_row <= budget:
            tile = cand
            break
    n_pad = _round_up(max(n_rows, 1), SUBLANE_BF16)
    if n_pad <= tile:
        if n_pad >= 2 * SUBLANE_BF16:       # split into >=2 tiles for megacore
            tile = _round_up(_cdiv(n_pad, 2), SUBLANE_BF16)
            n_pad = _round_up(n_rows, tile)
        else:
            tile = n_pad
    else:
        n_pad = _round_up(n_rows, tile)
    return tile, n_pad


def _pad_rows(x2d, n_pad):
    n = x2d.shape[0]
    return x2d if n == n_pad else jnp.pad(x2d, ((0, n_pad - n), (0, 0)))


# ----------------------------------------------------------------------------
# Pallas kernels
# ----------------------------------------------------------------------------
def _mlp_kernel(x_ref, w_ref, b_ref, o_ref):
    # per-pixel Linear: (tile, Cin) bf16 @ (Cin, Cpad) bf16 -> f32 acc -> + bias -> bf16
    y = jnp.dot(x_ref[...], w_ref[...], preferred_element_type=jnp.float32)
    o_ref[...] = (y + b_ref[...]).astype(o_ref.dtype)


def _make_head_kernel(lerp_flags):
    """Fused head for one (batch, output-row) grid step:
       in-kernel H-axis bilinear lerp -> virtual concat (sum of per-scale partial
       matmuls into folded-BN fusion weights) -> +shift -> ReLU -> conv_seg."""
    ns = len(lerp_flags)
    any_lerp = any(lerp_flags)

    def kernel(*refs):
        # refs = (y0_tab, y1_tab, *inputs..., o_ref); the scalar-prefetch tables are
        # consumed only by the index_maps.
        pos = 2
        per_scale = []
        for s in range(ns):
            cnt = 2 if lerp_flags[s] else 1
            per_scale.append(refs[pos:pos + cnt])
            pos += cnt
        lerp_ref = refs[pos]; pos += 1
        fuse_refs = refs[pos:pos + ns]; pos += ns
        shift_ref, seg_w_ref, seg_b_ref, o_ref = refs[pos:pos + 4]

        wl = lerp_ref[0] if any_lerp else None          # (2*nr, Cpad) f32
        acc = None
        k = 0
        for s in range(ns):
            if lerp_flags[s]:
                # H-axis bilinear lerp between the two prefetch-indexed source rows.
                top = per_scale[s][0][0, 0].astype(jnp.float32)
                bot = per_scale[s][1][0, 0].astype(jnp.float32)
                rows = top * wl[2 * k:2 * k + 1, :] + bot * wl[2 * k + 1:2 * k + 2, :]
                rows = rows.astype(jnp.bfloat16)
                k += 1
            else:
                rows = per_scale[s][0][0, 0]            # (out_w, Cpad) bf16
            part = jnp.dot(rows, fuse_refs[s][...],
                           preferred_element_type=jnp.float32)
            acc = part if acc is None else acc + part
        # BN scale already folded into fuse weights; only the shift remains.
        y = jnp.maximum(acc + shift_ref[...], 0.0)
        z = jnp.dot(y.astype(jnp.bfloat16), seg_w_ref[...],
                    preferred_element_type=jnp.float32) + seg_b_ref[...]
        o_ref[0, 0] = z.astype(o_ref.dtype)             # lane-dense (out_w, ncls_pad)

    return kernel


# ----------------------------------------------------------------------------
# Pallas wrappers
# ----------------------------------------------------------------------------
def mlp_pallas(x2d_bf16, w_bf16, b_f32, vmem_limit):
    n, cin = x2d_bf16.shape
    cpad = w_bf16.shape[1]
    resident_bytes = w_bf16.size * 2 + b_f32.size * 4
    tile, n_pad = _pick_row_tile(n, (cin + cpad) * 2, resident_bytes, vmem_limit)
    x_p = _pad_rows(x2d_bf16, n_pad)
    out = pl.pallas_call(
        _mlp_kernel,
        out_shape=jax.ShapeDtypeStruct((n_pad, cpad), jnp.bfloat16),
        grid=(n_pad // tile,),
        in_specs=[
            pl.BlockSpec((tile, cin), lambda i: (i, 0)),    # streamed activations
            pl.BlockSpec((cin, cpad), lambda i: (0, 0)),    # resident weight
            pl.BlockSpec((1, cpad), lambda i: (0, 0)),      # resident bias
        ],
        out_specs=pl.BlockSpec((tile, cpad), lambda i: (i, 0)),
        compiler_params=pltpu.CompilerParams(
            dimension_semantics=("parallel",),
            vmem_limit_bytes=int(vmem_limit)),
    )(x_p, w_bf16, b_f32)
    return out[:n] if n_pad != n else out


def head_pallas(feats, lerp_flags, y0_tab, y1_tab, lerp_tab, fuse_blocks,
                bn_shift, seg_w, seg_b, out_h, out_w, num_classes, vmem_limit):
    batch = feats[0].shape[0]
    cpad = fuse_blocks[0].shape[0]
    ncls_pad = seg_w.shape[1]

    in_specs, operands = [], []
    k = 0
    for s, f in enumerate(feats):
        if lerp_flags[s]:
            # Two source rows per output row, picked via scalar-prefetched tables.
            in_specs.append(pl.BlockSpec(
                (1, 1, out_w, cpad),
                lambda b, i, y0, y1, k=k: (b, y0[k, i], 0, 0)))
            in_specs.append(pl.BlockSpec(
                (1, 1, out_w, cpad),
                lambda b, i, y0, y1, k=k: (b, y1[k, i], 0, 0)))
            operands += [f, f]
            k += 1
        else:
            in_specs.append(pl.BlockSpec(
                (1, 1, out_w, cpad), lambda b, i, y0, y1: (b, i, 0, 0)))
            operands.append(f)
    # per-output-row lerp weights, broadcast along channels (pure VPU multiplies)
    in_specs.append(pl.BlockSpec((1, lerp_tab.shape[1], cpad),
                                 lambda b, i, y0, y1: (i, 0, 0)))
    operands.append(lerp_tab)
    # resident weights (constant index maps -> never re-fetched across steps)
    for wb in fuse_blocks:
        in_specs.append(pl.BlockSpec(wb.shape, lambda b, i, y0, y1: (0, 0)))
        operands.append(wb)
    for r in (bn_shift, seg_w, seg_b):
        in_specs.append(pl.BlockSpec(r.shape, lambda b, i, y0, y1: (0, 0)))
        operands.append(r)

    grid_spec = pltpu.PrefetchScalarGridSpec(
        num_scalar_prefetch=2,
        grid=(batch, out_h),
        in_specs=in_specs,
        out_specs=pl.BlockSpec((1, 1, out_w, ncls_pad),
                               lambda b, i, y0, y1: (b, i, 0, 0)),
    )
    out = pl.pallas_call(
        _make_head_kernel(tuple(lerp_flags)),
        out_shape=jax.ShapeDtypeStruct((batch, out_h, out_w, ncls_pad), jnp.float32),
        grid_spec=grid_spec,
        compiler_params=pltpu.CompilerParams(
            dimension_semantics=("parallel", "parallel"),
            vmem_limit_bytes=int(vmem_limit)),
    )(y0_tab, y1_tab, *operands)
    return out[..., :num_classes]


# ----------------------------------------------------------------------------
# Bilinear helpers (PyTorch F.interpolate, align_corners=False)
# ----------------------------------------------------------------------------
def _src_coords(out_size, in_size):
    scale = in_size / out_size
    s = (jnp.arange(out_size, dtype=jnp.float32) + 0.5) * scale - 0.5
    s = jnp.maximum(s, 0.0)
    i0 = jnp.minimum(jnp.floor(s).astype(jnp.int32), in_size - 1)
    i1 = jnp.minimum(i0 + 1, in_size - 1)
    lam = s - i0.astype(jnp.float32)
    return i0, i1, lam


def _wresize_nhwc(x, out_w):
    """W-axis resize only, done at low resolution in H (cheap JAX glue)."""
    b, h, w, c = x.shape
    if w == out_w:
        return x
    x0, x1, lx = _src_coords(out_w, w)
    left = x[:, :, x0, :].astype(jnp.float32)
    right = x[:, :, x1, :].astype(jnp.float32)
    lam = lx[None, None, :, None]
    return (left * (1.0 - lam) + right * lam).astype(x.dtype)


def bilinear_resize_nhwc(x, out_h, out_w):
    """Full 2-D bilinear resize in f32 (reference path only)."""
    b, h, w, c = x.shape
    if (h, w) == (out_h, out_w):
        return x
    y0, y1, ly = _src_coords(out_h, h)
    x0, x1, lx = _src_coords(out_w, w)
    lx = lx[None, None, :, None]
    ly = ly[None, :, None, None]
    r0 = x[:, y0, :, :]
    r1 = x[:, y1, :, :]
    top = r0[:, :, x0, :] * (1.0 - lx) + r0[:, :, x1, :] * lx
    bot = r1[:, :, x0, :] * (1.0 - lx) + r1[:, :, x1, :] * lx
    return top * (1.0 - ly) + bot * ly


# ----------------------------------------------------------------------------
# Full SegformerHead forward
# ----------------------------------------------------------------------------
def segformer_head_forward(inputs_nchw, params, *, in_index, channels, num_classes,
                           use_pallas=True):
    inputs = [inputs_nchw[i] for i in in_index]
    out_h, out_w = inputs[0].shape[2], inputs[0].shape[3]
    batch = inputs[0].shape[0]
    ns = len(inputs)

    # BatchNorm (eval mode) folded into per-channel scale/shift.
    eps = 1e-5
    inv_std = 1.0 / jnp.sqrt(params["bn_var"] + eps)
    bn_scale = params["bn_gamma"] * inv_std
    bn_shift = params["bn_beta"] - params["bn_mean"] * bn_scale

    if not use_pallas:
        # Pure-f32 jnp reference of the original module math.
        outs = []
        for idx, x in enumerate(inputs):
            b, ci, h, w = x.shape
            xh = jnp.transpose(x, (0, 2, 3, 1)).reshape(b * h * w, ci)
            y = (xh @ params[f"mlp{idx}_w"] + params[f"mlp{idx}_b"]).reshape(b, h, w, channels)
            outs.append(bilinear_resize_nhwc(y, out_h, out_w))
        feat = jnp.concatenate(outs, -1).reshape(batch * out_h * out_w, channels * ns)
        yb = (feat @ params["fuse_w"]) * bn_scale[None, :] + bn_shift[None, :]
        yb = jnp.maximum(yb, 0.0)
        logits = (yb @ params["seg_w"] + params["seg_b"]).reshape(batch, out_h, out_w, num_classes)
        return jnp.transpose(logits, (0, 3, 1, 2))

    cpad = _round_up(channels, LANE)                   # lane-dense feature channels
    ncls_pad = _round_up(num_classes, LANE)            # lane-dense logits
    vmem_limit = _vmem_limit_bytes()

    # Fold BN scale directly into the fusion weights (only the shift stays in-kernel),
    # split row-wise per scale so the channel concat is virtual inside the kernel.
    fuse_w_scaled = params["fuse_w"] * bn_scale[None, :]
    fuse_blocks = []
    for s in range(ns):
        blk = fuse_w_scaled[s * channels:(s + 1) * channels, :]
        blk = jnp.pad(blk, ((0, cpad - channels), (0, cpad - channels)))
        fuse_blocks.append(blk.astype(jnp.bfloat16))
    shift = jnp.pad(bn_shift, (0, cpad - channels)).reshape(1, cpad).astype(jnp.float32)
    seg_w = jnp.pad(params["seg_w"],
                    ((0, cpad - channels), (0, ncls_pad - num_classes))).astype(jnp.bfloat16)
    seg_b = jnp.pad(params["seg_b"],
                    ((0, 0), (0, ncls_pad - num_classes))).astype(jnp.float32)

    feats, lerp_flags = [], []
    y0_rows, y1_rows, lerp_cols = [], [], []
    for idx, x in enumerate(inputs):
        b, ci, h, w = x.shape
        xh = jnp.transpose(x, (0, 2, 3, 1)).reshape(b * h * w, ci).astype(jnp.bfloat16)
        wmat = jnp.pad(params[f"mlp{idx}_w"], ((0, 0), (0, cpad - channels))).astype(jnp.bfloat16)
        bias = jnp.pad(params[f"mlp{idx}_b"], ((0, 0), (0, cpad - channels))).astype(jnp.float32)
        y = mlp_pallas(xh, wmat, bias, vmem_limit).reshape(b, h, w, cpad)   # bf16
        y = _wresize_nhwc(y, out_w)                    # still low-res in H (cheap)
        feats.append(y)
        if h == out_h:
            lerp_flags.append(False)                   # H already at output resolution
        else:
            lerp_flags.append(True)
            y0, y1, ly = _src_coords(out_h, h)
            y0_rows.append(y0)
            y1_rows.append(y1)
            lerp_cols.append(jnp.stack([1.0 - ly, ly], axis=0))

    nr = len(y0_rows)
    if nr:
        y0_tab = jnp.stack(y0_rows, 0).astype(jnp.int32)          # (nr, out_h)
        y1_tab = jnp.stack(y1_rows, 0).astype(jnp.int32)
        lw = jnp.concatenate(lerp_cols, 0)                        # (2*nr, out_h)
        lerp_tab = jnp.broadcast_to(
            lw.T[:, :, None], (out_h, 2 * nr, cpad)).astype(jnp.float32)
    else:
        y0_tab = jnp.zeros((1, out_h), jnp.int32)
        y1_tab = y0_tab
        lerp_tab = jnp.zeros((out_h, 2, cpad), jnp.float32)

    logits = head_pallas(feats, lerp_flags, y0_tab, y1_tab, lerp_tab, fuse_blocks,
                         shift, seg_w, seg_b, out_h, out_w, num_classes, vmem_limit)
    return jnp.transpose(logits, (0, 3, 1, 2))                    # back to NCHW


# ----------------------------------------------------------------------------
# Deterministic synthetic parameters + demo
# ----------------------------------------------------------------------------
def make_params(key, in_channels, channels, num_classes):
    params = {}
    keys = jax.random.split(key, 4 * len(in_channels) + 8)
    k = 0
    for i, ci in enumerate(in_channels):
        params[f"mlp{i}_w"] = 0.05 * jax.random.normal(keys[k], (ci, channels), jnp.float32); k += 1
        params[f"mlp{i}_b"] = 0.01 * jax.random.normal(keys[k], (1, channels), jnp.float32); k += 1
    nin = len(in_channels)
    params["fuse_w"] = 0.05 * jax.random.normal(keys[k], (channels * nin, channels), jnp.float32); k += 1
    params["bn_gamma"] = 1.0 + 0.1 * jax.random.normal(keys[k], (channels,), jnp.float32); k += 1
    params["bn_beta"] = 0.01 * jax.random.normal(keys[k], (channels,), jnp.float32); k += 1
    params["bn_mean"] = 0.05 * jax.random.normal(keys[k], (channels,), jnp.float32); k += 1
    params["bn_var"] = 0.5 + jax.nn.softplus(jax.random.normal(keys[k], (channels,), jnp.float32)); k += 1
    params["seg_w"] = 0.05 * jax.random.normal(keys[k], (channels, num_classes), jnp.float32); k += 1
    params["seg_b"] = 0.01 * jax.random.normal(keys[k], (1, num_classes), jnp.float32); k += 1
    return params


if __name__ == "__main__":
    in_channels = (8, 16, 24, 32)
    channels = 32
    num_classes = 5
    in_index = (0, 1, 2, 3)
    batch = 2
    spatials = ((16, 16), (8, 8), (4, 4), (2, 2))   # multi-scale backbone features

    root = jax.random.PRNGKey(0)
    pkey, *xkeys = jax.random.split(root, 1 + len(in_channels))
    params = make_params(pkey, in_channels, channels, num_classes)
    inputs = [
        jax.random.normal(xkeys[i], (batch, in_channels[i], spatials[i][0], spatials[i][1]),
                          jnp.float32)
        for i in range(len(in_channels))
    ]

    fwd = functools.partial(segformer_head_forward, in_index=in_index,
                            channels=channels, num_classes=num_classes)

    logits = jax.block_until_ready(fwd(inputs, params, use_pallas=True))
    assert logits.shape == (batch, num_classes, spatials[0][0], spatials[0][1])

    # cross-check Pallas (bf16-streamed) kernels against a pure-f32 jnp reference
    ref = jax.block_until_ready(fwd(inputs, params, use_pallas=False))
    err = float(jnp.max(jnp.abs(logits - ref)))
    assert err < 2e-2, f"Pallas vs jnp reference mismatch (max abs err {err})"

    print("KERNEL_OK")
</pallas_src>

<mosaic_0001>
module attributes {stable_mosaic.version = 11 : i64} {
  func.func @_mlp_kernel(%arg0: i32, %arg1: memref<256x8xbf16, #tpu.memory_space<vmem>>, %arg2: memref<8x128xbf16, #tpu.memory_space<vmem>>, %arg3: memref<1x128xf32, #tpu.memory_space<vmem>>, %arg4: memref<256x128xbf16, #tpu.memory_space<vmem>>) attributes {dimension_semantics = [#tpu.dimension_semantics<parallel>], iteration_bounds = array<i64: 2>, scalar_prefetch = 0 : i64, scratch_operands = 0 : i64, tpu.core_type = #tpu.core_type<tc>, window_params = [{transform_indices = @transform_0, window_bounds = array<i64: 256, 8>}, {pipeline_mode = #tpu.pipeline_mode<synchronous>, transform_indices = @transform_1, window_bounds = array<i64: 8, 128>}, {pipeline_mode = #tpu.pipeline_mode<synchronous>, transform_indices = @transform_2, window_bounds = array<i64: 1, 128>}, {transform_indices = @transform_3, window_bounds = array<i64: 256, 128>}]} {
    %c0 = arith.constant 0 : index
    %c0_0 = arith.constant 0 : index
    %0 = vector.load %arg1[%c0, %c0_0] : memref<256x8xbf16, #tpu.memory_space<vmem>>, vector<256x8xbf16>
    %c0_1 = arith.constant 0 : index
    %c0_2 = arith.constant 0 : index
    %1 = vector.load %arg2[%c0_1, %c0_2] : memref<8x128xbf16, #tpu.memory_space<vmem>>, vector<8x128xbf16>
    %cst = arith.constant dense<0.000000e+00> : vector<256x128xf32>
    %2 = tpu.matmul %0, %1, %cst {dimension_numbers = #tpu.dot_dimension_numbers<[1], [0], [0], [1], [0, 0, 1, 1], [], []>} : vector<256x8xbf16>, vector<8x128xbf16>, vector<256x128xf32> -> vector<256x128xf32>
    %c0_3 = arith.constant 0 : index
    %c0_4 = arith.constant 0 : index
    %3 = vector.load %arg3[%c0_3, %c0_4] : memref<1x128xf32, #tpu.memory_space<vmem>>, vector<1x128xf32>
    %4 = vector.broadcast %3 : vector<1x128xf32> to vector<256x128xf32>
    %5 = arith.addf %2, %4 : vector<256x128xf32>
    %6 = arith.truncf %5 : vector<256x128xf32> to vector<256x128xbf16>
    %c0_5 = arith.constant 0 : index
    %c0_6 = arith.constant 0 : index
    %7 = vector.load %arg4[%c0_5, %c0_6] : memref<256x128xbf16, #tpu.memory_space<vmem>>, vector<256x128xbf16>
    tpu.vector_store %arg4[%c0_5, %c0_6], %6 {strides = array<i32>} : memref<256x128xbf16, #tpu.memory_space<vmem>>, vector<256x128xbf16>,
    return
  }
  func.func @transform_0(%arg0: i32) -> (i32, i32) {
    %c0_i32 = arith.constant 0 : i32
    %c0_i32_0 = arith.constant 0 : i32
    return %arg0, %c0_i32 : i32, i32
  }
  func.func @transform_1(%arg0: i32) -> (i32, i32) {
    %c0_i32 = arith.constant 0 : i32
    %c0_i32_0 = arith.constant 0 : i32
    %c0_i32_1 = arith.constant 0 : i32
    return %c0_i32, %c0_i32_0 : i32, i32
  }
  func.func @transform_2(%arg0: i32) -> (i32, i32) {
    %c0_i32 = arith.constant 0 : i32
    %c0_i32_0 = arith.constant 0 : i32
    %c0_i32_1 = arith.constant 0 : i32
    return %c0_i32, %c0_i32_0 : i32, i32
  }
  func.func @transform_3(%arg0: i32) -> (i32, i32) {
    %c0_i32 = arith.constant 0 : i32
    %c0_i32_0 = arith.constant 0 : i32
    return %arg0, %c0_i32 : i32, i32
  }
}

</mosaic_0001>

<llo_original>
// kernel: tpu_custom_call.1
$region0: #{tpu_custom_call.1}
  #allocation0 [shape = 'u32[]', space=smem, size = 0x4, offset = 0x4, fixed_abs, tag = 'smem constant byte address 0x4 - core index']
  #allocation1 [shape = 'u32[144,128]{1,0:T(1,128)}', space=vmem, size = 0x12000, scoped, tag = 'internal scratch']
  %s0 = inlined_call_operand.vmem [shape: bf16[512,8], index: 0, kind: input, shape index: {}]
  %s1 = inlined_call_operand.vmem [shape: bf16[8,128], index: 1, kind: input, shape index: {}]
  %s2 = inlined_call_operand.vmem [shape: f32[1,128], index: 2, kind: input, shape index: {}]
  %s3 = inlined_call_operand.hbm [shape: bf16[512,128], index: 3, kind: output, shape index: {}]
  %s4 = sld [smem:[#allocation0]]
  $region45: #{tpu_custom_call.1} parent=0
    _
  %s6 = ssub.s32 1, %s4
  %s7 = scalar_select 0, %s6, %s4
  $region1: #{tpu_custom_call.1} parent=0
    #allocation2 [shape = 'u8[131072]{0}', space=vmem, size = 0x20000, scoped, tag = 'output window, operand 0']
    #allocation3 [shape = 's32[2]{0}', space=sflag, size = 0x8, scoped, tag = 'scoped memory for tpu_custom_call.1']
    %8 = vsyncpa [#allocation3], 0
    %s9 = scalar_lea.sflag [#allocation3], 1
    %10 = vsyncpa %s9, 0
    loop: start=0, step=1, limit=4
    $region2: #{tpu_custom_call.1} parent=1 // loop_pre_header
      _
    $region3: #{tpu_custom_call.1} parent=1 // loop_header
      %s12 = sphi 0, %s16
      %p13 = scmp.ge.s32.totalorder %s12, 4
      %s22 = sphi 0, %s24
      %s25 = sphi 0, %s22
      %s26 = sphi 0, %s25
      %s42 = sphi 0, %s26
      %s46 = sphi 0, %s46
      %s48 = sphi 0, %s46
      %s49 = sphi 0, %s48
      %s63 = sphi 0, %s49
      %s67 = sphi 0, %s67
      %s69 = sphi 0, %s67
      %s70 = sphi 0, %s69
      %s84 = sphi 0, %s70
      %s90 = sphi 0, %s92
      %s93 = sphi 0, %s90
      %s94 = sphi 0, %s93
      %s110 = sphi 0, %s94
    $region4: #{tpu_custom_call.1} parent=1 // loop_header_branch
      %15 = sbr.rel (%p13) target = $region8
    $region5: #{tpu_custom_call.1} parent=1 // loop_body
      %s17 = ssub.s32 %s12, 1
      %s18 = ssub.s32 %s12, 2
      %s19 = sadd.s32 %s12, 1
      %s20 = ssub.s32 %s12, %s19
      %p21 = scmp.eq.s32.totalorder %s20, 0
      %s23 = sadd.s32 %s22, 1
      %s24 = scalar_select %p21, %s22, %s23
      %p27 = pneg %p21
      %p28 = scmp.eq.s32.totalorder %s12, 1
      %p29 = por %p27, %p28
      %p30 = scmp.ne.s32.totalorder %s22, %s25
      %p31 = scmp.eq.s32.totalorder %s12, 0
      %p32 = por %p30, %p31
      %p33 = scmp.ne.s32.totalorder %s22, %s25
      %p34 = scmp.eq.s32.totalorder %s17, 1
      %p35 = por %p33, %p34
      %p36 = scmp.ne.s32.totalorder %s25, %s26
      %p37 = scmp.eq.s32.totalorder %s17, 0
      %p38 = por %p36, %p37
      %p39 = scmp.ne.s32.totalorder %s25, %s26
      %p40 = scmp.eq.s32.totalorder %s18, 1
      %p41 = por %p39, %p40
      %p43 = scmp.ne.s32.totalorder %s26, %s42
      %p44 = scmp.eq.s32.totalorder %s18, 0
      %p45 = por %p43, %p44
      %s47 = sadd.s32 %s46, 1
      %p50 = scmp.eq.s32.totalorder %s12, 1
      %p51 = scmp.ne.s32.totalorder %s46, %s48
      %p52 = scmp.eq.s32.totalorder %s12, 0
      %p53 = por %p51, %p52
      %p54 = scmp.ne.s32.totalorder %s46, %s48
      %p55 = scmp.eq.s32.totalorder %s17, 1
      %p56 = por %p54, %p55
      %p57 = scmp.ne.s32.totalorder %s48, %s49
      %p58 = scmp.eq.s32.totalorder %s17, 0
      %p59 = por %p57, %p58
      %p60 = scmp.ne.s32.totalorder %s48, %s49
      %p61 = scmp.eq.s32.totalorder %s18, 1
      %p62 = por %p60, %p61
      %p64 = scmp.ne.s32.totalorder %s49, %s63
      %p65 = scmp.eq.s32.totalorder %s18, 0
      %p66 = por %p64, %p65
      %s68 = sadd.s32 %s67, 1
      %p71 = scmp.eq.s32.totalorder %s12, 1
      %p72 = scmp.ne.s32.totalorder %s67, %s69
      %p73 = scmp.eq.s32.totalorder %s12, 0
      %p74 = por %p72, %p73
      %p75 = scmp.ne.s32.totalorder %s67, %s69
      %p76 = scmp.eq.s32.totalorder %s17, 1
      %p77 = por %p75, %p76
      %p78 = scmp.ne.s32.totalorder %s69, %s70
      %p79 = scmp.eq.s32.totalorder %s17, 0
      %p80 = por %p78, %p79
      %p81 = scmp.ne.s32.totalorder %s69, %s70
      %p82 = scmp.eq.s32.totalorder %s18, 1
      %p83 = por %p81, %p82
      %p85 = scmp.ne.s32.totalorder %s70, %s84
      %p86 = scmp.eq.s32.totalorder %s18, 0
      %p87 = por %p85, %p86
      %s88 = ssub.s32 %s12, %s19
      %p89 = scmp.eq.s32.totalorder %s88, 0
      %s91 = sadd.s32 %s90, 1
      %s92 = scalar_select %p89, %s90, %s91
      %p95 = pneg %p89
      %p96 = scmp.eq.s32.totalorder %s12, 1
      %p97 = por %p95, %p96
      %p98 = scmp.ne.s32.totalorder %s90, %s93
      %p99 = scmp.eq.s32.totalorder %s12, 0
      %p100 = por %p98, %p99
      %p101 = scmp.ne.s32.totalorder %s90, %s93
      %p102 = scmp.eq.s32.totalorder %s17, 1
      %p103 = por %p101, %p102
      %p104 = scmp.ne.s32.totalorder %s93, %s94
      %p105 = scmp.eq.s32.totalorder %s17, 0
      %p106 = por %p104, %p105
      %p107 = scmp.ne.s32.totalorder %s93, %s94
      %p108 = scmp.eq.s32.totalorder %s18, 1
      %p109 = por %p107, %p108
      %p111 = scmp.ne.s32.totalorder %s94, %s110
      %p112 = scmp.eq.s32.totalorder %s18, 0
      %p113 = por %p111, %p112
      %p114 = scmp.le.s32.totalorder 1, %s12
      %p115 = scmp.lt.s32.totalorder %s12, 3
      %p116 = pnand %p114, %p115
      %p117 = pneg %p116
      // Predicated region
      $region9: #{tpu_custom_call.1} parent=5 // pred_check
        _
      $region10: #{tpu_custom_call.1} parent=5 // pred_check_branch
        %119 = sbr.rel (%p116) target = $region12
      $region11: #{tpu_custom_call.1} parent=5 // pred_region
        %s120 = ssub.s32 %s12, 1
        // Predicated region
        $region13: #{tpu_custom_call.1} parent=11 // pred_check
          %p121 = pneg %p59
        $region14: #{tpu_custom_call.1} parent=11 // pred_check_branch
          %123 = sbr.rel (%p121) target = $region16
        $region15: #{tpu_custom_call.1} parent=11 // pred_region
          _
        $region16: #{tpu_custom_call.1} parent=11 // pred_fallthru
          _
        // Predicated region
        $region17: #{tpu_custom_call.1} parent=11 // pred_check
          %p124 = pneg %p80
        $region18: #{tpu_custom_call.1} parent=11 // pred_check_branch
          %126 = sbr.rel (%p124) target = $region20
        $region19: #{tpu_custom_call.1} parent=11 // pred_region
          _
        $region20: #{tpu_custom_call.1} parent=11 // pred_fallthru
          _
      $region12: #{tpu_custom_call.1} parent=5 // pred_fallthru
        _
      %p127 = scmp.lt.s32.totalorder %s12, 2
      // Predicated region
      $region21: #{tpu_custom_call.1} parent=5 // pred_check
        %p128 = pneg %p127
      $region22: #{tpu_custom_call.1} parent=5 // pred_check_branch
        %130 = sbr.rel (%p128) target = $region24
      $region23: #{tpu_custom_call.1} parent=5 // pred_region
        // Predicated region
        $region25: #{tpu_custom_call.1} parent=23 // pred_check
          %p131 = pneg %p32
        $region26: #{tpu_custom_call.1} parent=23 // pred_check_branch
          %133 = sbr.rel (%p131) target = $region28
        $region27: #{tpu_custom_call.1} parent=23 // pred_region
          %s134 = smul.u32 32, %s12
          %p135 = scmp.lt.s32.totalorder %s134, 63
          %s136 = scalar_select %p135, %s134, 63
          %s137 = smul.addr %s136, 4
          %s138 = scalar_lea.vmem %s0, %s137
          %s139 = smul.u32 32, %s12
        $region28: #{tpu_custom_call.1} parent=23 // pred_fallthru
          _
      $region24: #{tpu_custom_call.1} parent=5 // pred_fallthru
        _
      %p140 = scmp.le.s32.totalorder 1, %s12
      %p141 = scmp.lt.s32.totalorder %s12, 3
      %p142 = pnand %p140, %p141
      %p143 = pneg %p142
      // Predicated region
      $region29: #{tpu_custom_call.1} parent=5 // pred_check
        _
      $region30: #{tpu_custom_call.1} parent=5 // pred_check_branch
        %145 = sbr.rel (%p142) target = $region32
      $region31: #{tpu_custom_call.1} parent=5 // pred_region
        %s146 = ssub.s32 %s12, 1
        %s147 = smul.u32 32, %s17
        %p148 = scmp.lt.s32.totalorder %s147, 63
        %s149 = scalar_select %p148, %s147, 63
        %s150 = smul.addr %s149, 4
        %s151 = scalar_lea.vmem %s0, %s150
        %p152 = pneg %p38
        %p153 = pneg %p35
        %p154 = pneg %p59
        %p155 = pneg %p56
        %p156 = pneg %p80
        %p157 = pneg %p77
        %p158 = pneg %p106
        %p159 = pneg %p103
        %s160 = sand.u32 %s93, 1
        %s161 = scalar_lea.sflag [#allocation3], %s160
        %s162 = sand.u32 %s93, 1
        %s163 = smul.addr %s162, 128
        %s164 = scalar_lea.vmem [#allocation2], %s163
        %s165 = smul.u32 32, %s17
        %p166 = scmp.lt.s32.totalorder %s165, 63
        %s167 = scalar_select %p166, %s165, 63
        %s168 = smul.addr %s167, 4
        %s169 = scalar_lea.vmem %s0, %s168
        %s170 = smul.u32 32, %s17
        %s171 = smul.u32 32, %s17
        %v173 = vld [vmem:[%s169] sm:$0xf]
        %v174 = vld [vmem:[%s169 + $0x4] sm:$0xf]
        %v175 = vld [vmem:[%s169 + $0x8] sm:$0xf]
        %v176 = vld [vmem:[%s169 + $0xc] sm:$0xf]
        %v177 = vld [vmem:[%s169 + $0x10] sm:$0xf]
        %v178 = vld [vmem:[%s169 + $0x14] sm:$0xf]
        %v179 = vld [vmem:[%s169 + $0x18] sm:$0xf]
        %v180 = vld [vmem:[%s169 + $0x1c] sm:$0xf]
        %v181 = vld [vmem:[%s169 + $0x20] sm:$0xf]
        %v182 = vld [vmem:[%s169 + $0x24] sm:$0xf]
        %v183 = vld [vmem:[%s169 + $0x28] sm:$0xf]
        %v184 = vld [vmem:[%s169 + $0x2c] sm:$0xf]
        %v185 = vld [vmem:[%s169 + $0x30] sm:$0xf]
        %v186 = vld [vmem:[%s169 + $0x34] sm:$0xf]
        %v187 = vld [vmem:[%s169 + $0x38] sm:$0xf]
        %v188 = vld [vmem:[%s169 + $0x3c] sm:$0xf]
        %v189 = vld [vmem:[%s169 + $0x40] sm:$0xf]
        %v190 = vld [vmem:[%s169 + $0x44] sm:$0xf]
        %v191 = vld [vmem:[%s169 + $0x48] sm:$0xf]
        %v192 = vld [vmem:[%s169 + $0x4c] sm:$0xf]
        %v193 = vld [vmem:[%s169 + $0x50] sm:$0xf]
        %v194 = vld [vmem:[%s169 + $0x54] sm:$0xf]
        %v195 = vld [vmem:[%s169 + $0x58] sm:$0xf]
        %v196 = vld [vmem:[%s169 + $0x5c] sm:$0xf]
        %v197 = vld [vmem:[%s169 + $0x60] sm:$0xf]
        %v198 = vld [vmem:[%s169 + $0x64] sm:$0xf]
        %v199 = vld [vmem:[%s169 + $0x68] sm:$0xf]
        %v200 = vld [vmem:[%s169 + $0x6c] sm:$0xf]
        %v201 = vld [vmem:[%s169 + $0x70] sm:$0xf]
        %v202 = vld [vmem:[%s169 + $0x74] sm:$0xf]
        %v203 = vld [vmem:[%s169 + $0x78] sm:$0xf]
        %v204 = vld [vmem:[%s169 + $0x7c] sm:$0xf]
        %v205 = vld [vmem:[%s1] sm:$0xf]
        %v206 = vld [vmem:[%s2] sm:$0x1]
        %v208 = vlaneseq
        %v209 = vshrl.u32 %v208, 7
        %v210 = vsub.s32 0, %v209
        %v211 = vrot.slane %v206, %v210
        %v245 = vunpack.c.l.b16 %v173
        %v246 = vunpack.c.l.b16 %v174
        %v247 = vunpack.c.l.b16 %v175
        %v248 = vunpack.c.l.b16 %v176
        %v249 = vunpack.c.l.b16 %v177
        %v250 = vunpack.c.l.b16 %v178
        %v251 = vunpack.c.l.b16 %v179
        %v252 = vunpack.c.l.b16 %v180
        %v253 = vunpack.c.l.b16 %v181
        %v254 = vunpack.c.l.b16 %v182
        %v255 = vunpack.c.l.b16 %v183
        %v256 = vunpack.c.l.b16 %v184
        %v257 = vunpack.c.l.b16 %v185
        %v258 = vunpack.c.l.b16 %v186
        %v259 = vunpack.c.l.b16 %v187
        %v260 = vunpack.c.l.b16 %v188
        %v261 = vunpack.c.l.b16 %v189
        %v262 = vunpack.c.l.b16 %v190
        %v263 = vunpack.c.l.b16 %v191
        %v264 = vunpack.c.l.b16 %v192
        %v265 = vunpack.c.l.b16 %v193
        %v266 = vunpack.c.l.b16 %v194
        %v267 = vunpack.c.l.b16 %v195
        %v268 = vunpack.c.l.b16 %v196
        %v269 = vunpack.c.l.b16 %v197
        %v270 = vunpack.c.l.b16 %v198
        %v271 = vunpack.c.l.b16 %v199
        %v272 = vunpack.c.l.b16 %v200
        %v273 = vunpack.c.l.b16 %v201
        %v274 = vunpack.c.l.b16 %v202
        %v275 = vunpack.c.l.b16 %v203
        %v276 = vunpack.c.l.b16 %v204
        %v277 = vpack.c.b16 %v246, %v245
        %v278 = vpack.c.b16 %v248, %v247
        %v279 = vpack.c.b16 %v250, %v249
        %v280 = vpack.c.b16 %v252, %v251
        %v281 = vpack.c.b16 %v254, %v253
        %v282 = vpack.c.b16 %v256, %v255
        %v283 = vpack.c.b16 %v258, %v257
        %v284 = vpack.c.b16 %v260, %v259
        %v285 = vpack.c.b16 %v262, %v261
        %v286 = vpack.c.b16 %v264, %v263
        %v287 = vpack.c.b16 %v266, %v265
        %v288 = vpack.c.b16 %v268, %v267
        %v289 = vpack.c.b16 %v270, %v269
        %v290 = vpack.c.b16 %v272, %v271
        %v291 = vpack.c.b16 %v274, %v273
        %v292 = vpack.c.b16 %v276, %v275
        %vm293 = vcmask 64512
        %v295 = vsel %vm293, %v277, 0
        %v298 = vsel %vm293, %v278, 0
        %v301 = vsel %vm293, %v279, 0
        %v304 = vsel %vm293, %v280, 0
        %v307 = vsel %vm293, %v281, 0
        %v310 = vsel %vm293, %v282, 0
        %v313 = vsel %vm293, %v283, 0
        %v316 = vsel %vm293, %v284, 0
        %v319 = vsel %vm293, %v285, 0
        %v322 = vsel %vm293, %v286, 0
        %v325 = vsel %vm293, %v287, 0
        %v328 = vsel %vm293, %v288, 0
        %v331 = vsel %vm293, %v289, 0
        %v334 = vsel %vm293, %v290, 0
        %v337 = vsel %vm293, %v291, 0
        %v340 = vsel %vm293, %v292, 0
        %vm342 = vcmask 1043456
        %v344 = vsel %vm342, %v205, 0
        %346 = vmatprep.subr.bf16.mxu0 0
        %347 = vmatpush1.bf16.msra.mxu0 %v344
        %348 = vmatprep.subr.bf16.mxu0 0
        %349 = vmatpush1.bf16.msra.mxu0 0
        %350 = vmatprep.subr.bf16.mxu0 0
        %351 = vmatpush1.bf16.msra.mxu0 0
        %352 = vmatprep.subr.bf16.mxu0 0
        %353 = vmatpush1.bf16.msra.mxu0 0
        %354 = vmatprep.subr.bf16.mxu0 0
        %355 = vmatpush1.bf16.msra.mxu0 0
        %356 = vmatprep.subr.bf16.mxu0 0
        %357 = vmatpush1.bf16.msra.mxu0 0
        %358 = vmatprep.subr.bf16.mxu0 0
        %359 = vmatpush1.bf16.msra.mxu0 0
        %360 = vmatprep.subr.bf16.mxu0 0
        %361 = vmatpush1.bf16.msra.mxu0 0
        %362 = vmatprep.subr.bf16.mxu0 0
        %363 = vmatpush1.bf16.msra.mxu0 0
        %364 = vmatprep.subr.bf16.mxu0 0
        %365 = vmatpush1.bf16.msra.mxu0 0
        %366 = vmatprep.subr.bf16.mxu0 0
        %367 = vmatpush1.bf16.msra.mxu0 0
        %368 = vmatprep.subr.bf16.mxu0 0
        %369 = vmatpush1.bf16.msra.mxu0 0
        %370 = vmatprep.subr.bf16.mxu0 0
        %371 = vmatpush1.bf16.msra.mxu0 0
        %372 = vmatprep.subr.bf16.mxu0 0
        %373 = vmatpush1.bf16.msra.mxu0 0
        %374 = vmatprep.subr.bf16.mxu0 0
        %375 = vmatpush1.bf16.msra.mxu0 0
        %376 = vmatprep.subr.bf16.mxu0 0
        %377 = vmatpush1.bf16.msra.mxu0 0
        %378 = vmatprep.mubr.bf16.mxu0 0
        %379 = vmatmul.mubr.bf16.gmra.mrb[0].mxu0 %v295
        %v380 = vpop.f32.mrb[0].mxu0
        %v381 = vadd.f32 %v211, %v380
        %v382 = vpop.f32.mrb[0].mxu0
        %v383 = vpop.f32.mrb[0].mxu0
        %v384 = vadd.f32 %v211, %v383
        %v385 = vpop.f32.mrb[0].mxu0
        %386 = vmatprep.mubr.bf16.mxu0 0
        %387 = vmatmul.mubr.bf16.gmra.mrb[0].mxu0 %v298
        %v388 = vpop.f32.mrb[0].mxu0
        %v389 = vadd.f32 %v211, %v388
        %v390 = vpop.f32.mrb[0].mxu0
        %v391 = vpop.f32.mrb[0].mxu0
        %v392 = vadd.f32 %v211, %v391
        %v393 = vpop.f32.mrb[0].mxu0
        %394 = vmatprep.mubr.bf16.mxu0 0
        %395 = vmatmul.mubr.bf16.gmra.mrb[0].mxu0 %v301
        %v396 = vpop.f32.mrb[0].mxu0
        %v397 = vadd.f32 %v211, %v396
        %v398 = vpop.f32.mrb[0].mxu0
        %v399 = vpop.f32.mrb[0].mxu0
        %v400 = vadd.f32 %v211, %v399
        %v401 = vpop.f32.mrb[0].mxu0
        %402 = vmatprep.mubr.bf16.mxu0 0
        %403 = vmatmul.mubr.bf16.gmra.mrb[0].mxu0 %v304
        %v404 = vpop.f32.mrb[0].mxu0
        %v405 = vadd.f32 %v211, %v404
        %v406 = vpop.f32.mrb[0].mxu0
        %v407 = vpop.f32.mrb[0].mxu0
        %v408 = vadd.f32 %v211, %v407
        %v409 = vpop.f32.mrb[0].mxu0
        %410 = vmatprep.mubr.bf16.mxu0 0
        %411 = vmatmul.mubr.bf16.gmra.mrb[0].mxu0 %v307
        %v412 = vpop.f32.mrb[0].mxu0
        %v413 = vadd.f32 %v211, %v412
        %v414 = vpop.f32.mrb[0].mxu0
        %v415 = vpop.f32.mrb[0].mxu0
        %v416 = vadd.f32 %v211, %v415
        %v417 = vpop.f32.mrb[0].mxu0
        %418 = vmatprep.mubr.bf16.mxu0 0
        %419 = vmatmul.mubr.bf16.gmra.mrb[0].mxu0 %v310
        %v420 = vpop.f32.mrb[0].mxu0
        %v421 = vadd.f32 %v211, %v420
        %v422 = vpop.f32.mrb[0].mxu0
        %v423 = vpop.f32.mrb[0].mxu0
        %v424 = vadd.f32 %v211, %v423
        %v425 = vpop.f32.mrb[0].mxu0
        %426 = vmatprep.mubr.bf16.mxu0 0
        %427 = vmatmul.mubr.bf16.gmra.mrb[0].mxu0 %v313
        %v428 = vpop.f32.mrb[0].mxu0
        %v429 = vadd.f32 %v211, %v428
        %v430 = vpop.f32.mrb[0].mxu0
        %v431 = vpop.f32.mrb[0].mxu0
        %v432 = vadd.f32 %v211, %v431
        %v433 = vpop.f32.mrb[0].mxu0
        %434 = vmatprep.mubr.bf16.mxu0 0
        %435 = vmatmul.mubr.bf16.gmra.mrb[0].mxu0 %v316
        %v436 = vpop.f32.mrb[0].mxu0
        %v437 = vadd.f32 %v211, %v436
        %v438 = vpop.f32.mrb[0].mxu0
        %v439 = vpop.f32.mrb[0].mxu0
        %v440 = vadd.f32 %v211, %v439
        %v441 = vpop.f32.mrb[0].mxu0
        %442 = vmatprep.mubr.bf16.mxu0 0
        %443 = vmatmul.mubr.bf16.gmra.mrb[0].mxu0 %v319
        %v444 = vpop.f32.mrb[0].mxu0
        %v445 = vadd.f32 %v211, %v444
        %v446 = vpop.f32.mrb[0].mxu0
        %v447 = vpop.f32.mrb[0].mxu0
        %v448 = vadd.f32 %v211, %v447
        %v449 = vpop.f32.mrb[0].mxu0
        %450 = vmatprep.mubr.bf16.mxu0 0
        %451 = vmatmul.mubr.bf16.gmra.mrb[0].mxu0 %v322
        %v452 = vpop.f32.mrb[0].mxu0
        %v453 = vadd.f32 %v211, %v452
        %v454 = vpop.f32.mrb[0].mxu0
        %v455 = vpop.f32.mrb[0].mxu0
        %v456 = vadd.f32 %v211, %v455
        %v457 = vpop.f32.mrb[0].mxu0
        %458 = vmatprep.mubr.bf16.mxu0 0
        %459 = vmatmul.mubr.bf16.gmra.mrb[0].mxu0 %v325
        %v460 = vpop.f32.mrb[0].mxu0
        %v461 = vadd.f32 %v211, %v460
        %v462 = vpop.f32.mrb[0].mxu0
        %v463 = vpop.f32.mrb[0].mxu0
        %v464 = vadd.f32 %v211, %v463
        %v465 = vpop.f32.mrb[0].mxu0
        %466 = vmatprep.mubr.bf16.mxu0 0
        %467 = vmatmul.mubr.bf16.gmra.mrb[0].mxu0 %v328
        %v468 = vpop.f32.mrb[0].mxu0
        %v469 = vadd.f32 %v211, %v468
        %v470 = vpop.f32.mrb[0].mxu0
        %v471 = vpop.f32.mrb[0].mxu0
        %v472 = vadd.f32 %v211, %v471
        %v473 = vpop.f32.mrb[0].mxu0
        %474 = vmatprep.mubr.bf16.mxu0 0
        %475 = vmatmul.mubr.bf16.gmra.mrb[0].mxu0 %v331
        %v476 = vpop.f32.mrb[0].mxu0
        %v477 = vadd.f32 %v211, %v476
        %v478 = vpop.f32.mrb[0].mxu0
        %v479 = vpop.f32.mrb[0].mxu0
        %v480 = vadd.f32 %v211, %v479
        %v481 = vpop.f32.mrb[0].mxu0
        %482 = vmatprep.mubr.bf16.mxu0 0
        %483 = vmatmul.mubr.bf16.gmra.mrb[0].mxu0 %v334
        %v484 = vpop.f32.mrb[0].mxu0
        %v485 = vadd.f32 %v211, %v484
        %v486 = vpop.f32.mrb[0].mxu0
        %v487 = vpop.f32.mrb[0].mxu0
        %v488 = vadd.f32 %v211, %v487
        %v489 = vpop.f32.mrb[0].mxu0
        %490 = vmatprep.mubr.bf16.mxu0 0
        %491 = vmatmul.mubr.bf16.gmra.mrb[0].mxu0 %v337
        %v492 = vpop.f32.mrb[0].mxu0
        %v493 = vadd.f32 %v211, %v492
        %v494 = vpop.f32.mrb[0].mxu0
        %v495 = vpop.f32.mrb[0].mxu0
        %v496 = vadd.f32 %v211, %v495
        %v497 = vpop.f32.mrb[0].mxu0
        %498 = vmatprep.mubr.bf16.mxu0 0
        %499 = vmatmul.mubr.bf16.gmra.mrb[0].mxu0 %v340
        %v500 = vpop.f32.mrb[0].mxu0
        %v501 = vadd.f32 %v211, %v500
        %v502 = vpop.f32.mrb[0].mxu0
        %v503 = vpop.f32.mrb[0].mxu0
        %v504 = vadd.f32 %v211, %v503
        %v505 = vpop.f32.mrb[0].mxu0
        %506 = vdwg.mxu0
        %v507 = vpack.c.bf16 %v384, %v381
        %v508 = vpack.c.bf16 %v392, %v389
        %v509 = vpack.c.bf16 %v400, %v397
        %v510 = vpack.c.bf16 %v408, %v405
        %v511 = vpack.c.bf16 %v416, %v413
        %v512 = vpack.c.bf16 %v424, %v421
        %v513 = vpack.c.bf16 %v432, %v429
        %v514 = vpack.c.bf16 %v440, %v437
        %v515 = vpack.c.bf16 %v448, %v445
        %v516 = vpack.c.bf16 %v456, %v453
        %v517 = vpack.c.bf16 %v464, %v461
        %v518 = vpack.c.bf16 %v472, %v469
        %v519 = vpack.c.bf16 %v480, %v477
        %v520 = vpack.c.bf16 %v488, %v485
        %v521 = vpack.c.bf16 %v496, %v493
        %v522 = vpack.c.bf16 %v504, %v501
        %v539 = vunpack.c.l.b16 %v507
        %v540 = vunpack.c.h.b16 %v507
        %v541 = vunpack.c.l.b16 %v508
        %v542 = vunpack.c.h.b16 %v508
        %v543 = vunpack.c.l.b16 %v509
        %v544 = vunpack.c.h.b16 %v509
        %v545 = vunpack.c.l.b16 %v510
        %v546 = vunpack.c.h.b16 %v510
        %v547 = vunpack.c.l.b16 %v511
        %v548 = vunpack.c.h.b16 %v511
        %v549 = vunpack.c.l.b16 %v512
        %v550 = vunpack.c.h.b16 %v512
        %v551 = vunpack.c.l.b16 %v513
        %v552 = vunpack.c.h.b16 %v513
        %v553 = vunpack.c.l.b16 %v514
        %v554 = vunpack.c.h.b16 %v514
        %v555 = vunpack.c.l.b16 %v515
        %v556 = vunpack.c.h.b16 %v515
        %v557 = vunpack.c.l.b16 %v516
        %v558 = vunpack.c.h.b16 %v516
        %v559 = vunpack.c.l.b16 %v517
        %v560 = vunpack.c.h.b16 %v517
        %v561 = vunpack.c.l.b16 %v518
        %v562 = vunpack.c.h.b16 %v518
        %v563 = vunpack.c.l.b16 %v519
        %v564 = vunpack.c.h.b16 %v519
        %v565 = vunpack.c.l.b16 %v520
        %v566 = vunpack.c.h.b16 %v520
        %v567 = vunpack.c.l.b16 %v521
        %v568 = vunpack.c.h.b16 %v521
        %v569 = vunpack.c.l.b16 %v522
        %v570 = vunpack.c.h.b16 %v522
        %v571 = vpack.c.b16 %v539, %v539
        %v572 = vpack.c.b16 %v540, %v540
        %v573 = vpack.c.b16 %v541, %v541
        %v574 = vpack.c.b16 %v542, %v542
        %v575 = vpack.c.b16 %v543, %v543
        %v576 = vpack.c.b16 %v544, %v544
        %v577 = vpack.c.b16 %v545, %v545
        %v578 = vpack.c.b16 %v546, %v546
        %v579 = vpack.c.b16 %v547, %v547
        %v580 = vpack.c.b16 %v548, %v548
        %v581 = vpack.c.b16 %v549, %v549
        %v582 = vpack.c.b16 %v550, %v550
        %v583 = vpack.c.b16 %v551, %v551
        %v584 = vpack.c.b16 %v552, %v552
        %v585 = vpack.c.b16 %v553, %v553
        %v586 = vpack.c.b16 %v554, %v554
        %v587 = vpack.c.b16 %v555, %v555
        %v588 = vpack.c.b16 %v556, %v556
        %v589 = vpack.c.b16 %v557, %v557
        %v590 = vpack.c.b16 %v558, %v558
        %v591 = vpack.c.b16 %v559, %v559
        %v592 = vpack.c.b16 %v560, %v560
        %v593 = vpack.c.b16 %v561, %v561
        %v594 = vpack.c.b16 %v562, %v562
        %v595 = vpack.c.b16 %v563, %v563
        %v596 = vpack.c.b16 %v564, %v564
        %v597 = vpack.c.b16 %v565, %v565
        %v598 = vpack.c.b16 %v566, %v566
        %v599 = vpack.c.b16 %v567, %v567
        %v600 = vpack.c.b16 %v568, %v568
        %v601 = vpack.c.b16 %v569, %v569
        %v602 = vpack.c.b16 %v570, %v570
        %635 = vst [vmem:[%s164] sm:$0xf] %v571
        %636 = vst [vmem:[%s164 + $0x4] sm:$0xf] %v572
        %637 = vst [vmem:[%s164 + $0x8] sm:$0xf] %v573
        %638 = vst [vmem:[%s164 + $0xc] sm:$0xf] %v574
        %639 = vst [vmem:[%s164 + $0x10] sm:$0xf] %v575
        %640 = vst [vmem:[%s164 + $0x14] sm:$0xf] %v576
        %641 = vst [vmem:[%s164 + $0x18] sm:$0xf] %v577
        %642 = vst [vmem:[%s164 + $0x1c] sm:$0xf] %v578
        %643 = vst [vmem:[%s164 + $0x20] sm:$0xf] %v579
        %644 = vst [vmem:[%s164 + $0x24] sm:$0xf] %v580
        %645 = vst [vmem:[%s164 + $0x28] sm:$0xf] %v581
        %646 = vst [vmem:[%s164 + $0x2c] sm:$0xf] %v582
        %647 = vst [vmem:[%s164 + $0x30] sm:$0xf] %v583
        %648 = vst [vmem:[%s164 + $0x34] sm:$0xf] %v584
        %649 = vst [vmem:[%s164 + $0x38] sm:$0xf] %v585
        %650 = vst [vmem:[%s164 + $0x3c] sm:$0xf] %v586
        %651 = vst [vmem:[%s164 + $0x40] sm:$0xf] %v587
        %652 = vst [vmem:[%s164 + $0x44] sm:$0xf] %v588
        %653 = vst [vmem:[%s164 + $0x48] sm:$0xf] %v589
        %654 = vst [vmem:[%s164 + $0x4c] sm:$0xf] %v590
        %655 = vst [vmem:[%s164 + $0x50] sm:$0xf] %v591
        %656 = vst [vmem:[%s164 + $0x54] sm:$0xf] %v592
        %657 = vst [vmem:[%s164 + $0x58] sm:$0xf] %v593
        %658 = vst [vmem:[%s164 + $0x5c] sm:$0xf] %v594
        %659 = vst [vmem:[%s164 + $0x60] sm:$0xf] %v595
        %660 = vst [vmem:[%s164 + $0x64] sm:$0xf] %v596
        %661 = vst [vmem:[%s164 + $0x68] sm:$0xf] %v597
        %662 = vst [vmem:[%s164 + $0x6c] sm:$0xf] %v598
        %663 = vst [vmem:[%s164 + $0x70] sm:$0xf] %v599
        %664 = vst [vmem:[%s164 + $0x74] sm:$0xf] %v600
        %665 = vst [vmem:[%s164 + $0x78] sm:$0xf] %v601
        %666 = vst [vmem:[%s164 + $0x7c] sm:$0xf] %v602
        %s667 = sand.u32 %s93, 1
        %s668 = scalar_lea.sflag [#allocation3], %s667
        %s669 = sand.u32 %s93, 1
        %s670 = smul.addr %s669, 128
        %s671 = scalar_lea.vmem [#allocation2], %s670
        // Predicated region
        $region33: #{tpu_custom_call.1} parent=31 // pred_check
          %p672 = pneg %p103
        $region34: #{tpu_custom_call.1} parent=31 // pred_check_branch
          %674 = sbr.rel (%p672) target = $region36
        $region35: #{tpu_custom_call.1} parent=31 // pred_region
          %s675 = smul.u32 32, %s17
          %s677 = ssub.s32 2048, 2048
          %678 = vsyncadd %s668, %s677
          %s679 = smul.addr %s675, 64
          %s680 = scalar_lea.hbm %s3, %s679
          %s681 = sshll.u32 %s671, 4
          %s682 = int_to_ptr.vmem [resolvable:$true] %s681
          %687 = dma.vmem_to_hbm [thread:$0]  %s682, 2048, %s680, %s668, 64, 64, 4
        $region36: #{tpu_custom_call.1} parent=31 // pred_fallthru
          _
      $region32: #{tpu_custom_call.1} parent=5 // pred_fallthru
        _
      %p688 = scmp.le.s32.totalorder 2, %s12
      // Predicated region
      $region37: #{tpu_custom_call.1} parent=5 // pred_check
        %p689 = pneg %p688
      $region38: #{tpu_custom_call.1} parent=5 // pred_check_branch
        %691 = sbr.rel (%p689) target = $region40
      $region39: #{tpu_custom_call.1} parent=5 // pred_region
        %s692 = ssub.s32 %s12, 2
        // Predicated region
        $region41: #{tpu_custom_call.1} parent=39 // pred_check
          %p693 = pneg %p109
        $region42: #{tpu_custom_call.1} parent=39 // pred_check_branch
          %695 = sbr.rel (%p693) target = $region44
        $region43: #{tpu_custom_call.1} parent=39 // pred_region
          %s696 = sand.u32 %s94, 1
          %s697 = scalar_lea.sflag [#allocation3], %s696
          %s698 = sand.u32 %s94, 1
          %s699 = smul.addr %s698, 128
          %s700 = scalar_lea.vmem [#allocation2], %s699
          %701 = dma.done %s697, 2048
        $region44: #{tpu_custom_call.1} parent=39 // pred_fallthru
          _
      $region40: #{tpu_custom_call.1} parent=5 // pred_fallthru
        _
    $region6: #{tpu_custom_call.1} parent=1 // loop_footer
      %s16 = sadd.s32 1, %s12
    $region7: #{tpu_custom_call.1} parent=1 // loop_footer_branch
      %11 = sbr.rel target = $region3
    $region8: #{tpu_custom_call.1} parent=1 // loop_exit
      _
    %702 = vsyncpa [#allocation3], 1
    %s703 = scalar_lea.sflag [#allocation3], 1
    %704 = vsyncpa %s703, 1

</llo_original>
